<compile_context>
chip_gen: v7x
topology: tpu7x:2x2x1
jax: 0.10.0
libtpu: 0.0.40
codegen_flags: <defaults>
</compile_context>

<pallas_src>
import functools
import math

import jax
import jax.numpy as jnp
from jax.experimental import pallas as pl
from jax.experimental.pallas import tpu as pltpu

EPS = 1e-5
_LOG_EPS = math.log(EPS)


def _seedloss_kernel(pred_ref, tgt_ref, out_ref,
                     fg_wl_acc, bg_wl_acc, fg_cnt_acc, bg_cnt_acc,
                     *, hw_size, tile, ragged):
    """One (NB, C, T) tile of one batch block.

    pred_ref/tgt_ref : (NB, C, T) VMEM tiles in their native dtype.
    out_ref          : (NB, 1, 128) VMEM; per-sample loss broadcast over the
                       lanes, written once at the last HW tile.
    *_acc            : (NB, 1, T) f32 VMEM vector accumulators; scalarized
                       (cross-lane reduced) only at the last HW tile.
    """
    hw = pl.program_id(1)
    n_hw = pl.num_programs(1)

    @pl.when(hw == 0)
    def _():
        fg_wl_acc[...] = jnp.zeros_like(fg_wl_acc)
        bg_wl_acc[...] = jnp.zeros_like(bg_wl_acc)
        fg_cnt_acc[...] = jnp.zeros_like(fg_cnt_acc)
        bg_cnt_acc[...] = jnp.zeros_like(bg_cnt_acc)

    # In-kernel cast (cheap VPU work); HBM stays in the native input dtype.
    x = pred_ref[...].astype(jnp.float32)   # (NB, C, T) logits
    t = tgt_ref[...].astype(jnp.float32)    # (NB, C, T) 0/1 seed labels

    # log(my_softmax(x)) where my_softmax = renormalized clamp(softmax,eps,1):
    #   log(clamp(softmax, eps, 1)) = max((x - m) - log(sum_e), log(eps))
    #   log(my_softmax)             = the above - log(sum_c clamp(softmax,eps,1))
    m = jnp.max(x, axis=1, keepdims=True)              # (NB, 1, T)
    xm = x - m
    e = jnp.exp(xm)                                    # (NB, C, T)
    sum_e = jnp.sum(e, axis=1, keepdims=True)          # (NB, 1, T)
    inv = pl.reciprocal(sum_e)                         # (NB, 1, T)
    sum_p = jnp.sum(jnp.maximum(e * inv, EPS), axis=1, keepdims=True)
    logp = (jnp.maximum(xm - jnp.log(sum_e), _LOG_EPS)
            - jnp.log(sum_p))                          # (NB, C, T)

    wl = t * logp
    if ragged:
        # The last HW tile reads unspecified data past HW; mask it with
        # jnp.where (NOT multiply) so 0*NaN/Inf cannot poison the sums.
        col = hw * tile + jax.lax.broadcasted_iota(jnp.int32, (1, 1, tile), 2)
        valid = col < hw_size
        wl = jnp.where(valid, wl, 0.0)
        t = jnp.where(valid, t, 0.0)

    # Channel 0 is background, channels 1: are foreground (static slices).
    bg_wl = wl[:, 0:1, :]                                      # (NB, 1, T)
    fg_wl = jnp.sum(wl, axis=1, keepdims=True) - bg_wl
    bg_t = t[:, 0:1, :]
    fg_t = jnp.sum(t, axis=1, keepdims=True) - bg_t

    fg_wl_acc[...] += fg_wl
    bg_wl_acc[...] += bg_wl
    fg_cnt_acc[...] += fg_t
    bg_cnt_acc[...] += bg_t

    @pl.when(hw == n_hw - 1)
    def _():
        fg_s = jnp.sum(fg_wl_acc[...], axis=2, keepdims=True)   # (NB, 1, 1)
        bg_s = jnp.sum(bg_wl_acc[...], axis=2, keepdims=True)
        fg_c = jnp.sum(fg_cnt_acc[...], axis=2, keepdims=True)
        bg_c = jnp.sum(bg_cnt_acc[...], axis=2, keepdims=True)
        # Per-sample contribution of loss_fg + loss_bg (before -mean over N).
        val = fg_s / (fg_c + EPS) + bg_s / (bg_c + EPS)          # (NB, 1, 1)
        out_ref[...] = jnp.broadcast_to(val, out_ref.shape)


def seedloss(predict, target, *, elem_budget=512 * 1024, lane_cap=64 * 1024):
    """Balanced seed loss.  predict/target: (N, C, H, W); target is a 0/1 seed
    mask in any dtype (f32 / bf16 / int8 / bool) — it is cast in-kernel.

    elem_budget: max elements (NB*C*T) per grid step; bounds both the per-step
      DMA size and the size of the f32 intermediates so total VMEM stays well
      under a v7x TensorCore's 64 MiB while being large enough (multi-MB per
      step) to amortize per-step overhead on v5e/v6e/v7x.
    lane_cap: upper bound on the lane tile T (rounded down to a multiple of 128).
    """
    N, C, H, W = predict.shape
    HW = H * W

    pred = predict.reshape(N, C, HW)
    tgt = target.reshape(N, C, HW)

    # --- lane tile (HW axis), always a multiple of 128 -----------------------
    lane_cap = max(128, (lane_cap // 128) * 128)
    hw_aligned = pl.cdiv(HW, 128) * 128
    t_budget = max(128, ((elem_budget // max(C, 1)) // 128) * 128)
    T = min(hw_aligned, lane_cap, t_budget)
    num_tiles = pl.cdiv(HW, T)

    # --- small-HW fast path: block several samples per grid step -------------
    NB = 1
    if num_tiles <= 2 and N > 1:
        NB = max(1, min(N, elem_budget // max(C * T, 1)))
    num_batch_blocks = pl.cdiv(N, NB)

    # Mask the ragged last tile in-kernel instead of jnp.pad-ing the inputs.
    ragged = (num_tiles * T != HW)

    kernel = functools.partial(_seedloss_kernel,
                               hw_size=HW, tile=T, ragged=ragged)

    per_sample = pl.pallas_call(
        kernel,
        out_shape=jax.ShapeDtypeStruct((N, 1, 128), jnp.float32),
        grid_spec=pltpu.PrefetchScalarGridSpec(
            num_scalar_prefetch=0,
            grid=(num_batch_blocks, num_tiles),
            in_specs=[
                pl.BlockSpec((NB, C, T), lambda i, hw: (i, 0, hw)),
                pl.BlockSpec((NB, C, T), lambda i, hw: (i, 0, hw)),
            ],
            out_specs=pl.BlockSpec((NB, 1, 128), lambda i, hw: (i, 0, 0)),
            scratch_shapes=[pltpu.VMEM((NB, 1, T), jnp.float32)] * 4,
        ),
        compiler_params=pltpu.CompilerParams(
            dimension_semantics=("parallel", "arbitrary"),
            # Above the 16/32 MiB scoped defaults (v5e / v6e+), below the
            # 64 MiB physical VMEM of a v7x TensorCore.
            vmem_limit_bytes=48 * 1024 * 1024,
        ),
    )(pred, tgt)

    # Final -mean over the batch (linear, so combining fg/bg means is exact).
    return -jnp.mean(per_sample[:, 0, 0])


def seedloss_ref(predict, target):
    """Pure-JAX reference mirroring the PyTorch forward."""
    eps = EPS
    predict = predict.astype(jnp.float32)
    target = target.astype(jnp.float32)
    p = jax.nn.softmax(predict, axis=1)
    p = jnp.clip(p, eps, 1.0)
    p = p / jnp.sum(p, axis=1, keepdims=True)
    logp = jnp.log(p)
    fg_prob, fg_label = logp[:, 1:], target[:, 1:]
    bg_prob, bg_label = logp[:, 0:1], target[:, 0:1]
    fg_count = jnp.sum(fg_label, axis=(1, 2, 3)) + eps
    bg_count = jnp.sum(bg_label, axis=(1, 2, 3)) + eps
    loss_fg = -jnp.mean(jnp.sum(fg_label * fg_prob, axis=(1, 2, 3)) / fg_count)
    loss_bg = -jnp.mean(jnp.sum(bg_label * bg_prob, axis=(1, 2, 3)) / bg_count)
    return loss_bg + loss_fg


def _make_inputs(key, n, c, h, w, tgt_dtype=jnp.float32):
    k1, k2, k3 = jax.random.split(key, 3)
    predict = jax.random.normal(k1, (n, c, h, w), dtype=jnp.float32)
    labels = jax.random.randint(k2, (n, h, w), 0, c)
    onehot = jax.nn.one_hot(labels, c, dtype=jnp.float32)          # (N,H,W,C)
    keep = (jax.random.uniform(k3, (n, h, w)) < 0.6).astype(jnp.float32)
    target = jnp.transpose(onehot * keep[..., None], (0, 3, 1, 2))  # (N,C,H,W)
    return predict, target.astype(tgt_dtype)


if __name__ == "__main__":
    key = jax.random.PRNGKey(0)
    ka, kb = jax.random.split(key, 2)

    # Test 1: small feature map -> single grid step (fast path, NB = N = 2).
    predict, target = _make_inputs(ka, 2, 4, 16, 16)
    loss = seedloss(predict, target)
    jax.block_until_ready(loss)
    ref = seedloss_ref(predict, target)
    assert jnp.allclose(loss, ref, rtol=1e-5, atol=1e-5), (loss, ref)

    # Test 2: non-128-multiple HW + forced small tile -> exercises the ragged
    # in-kernel masking and the multi-tile vector accumulators; target int8.
    predict2, target2 = _make_inputs(kb, 2, 5, 13, 11, tgt_dtype=jnp.int8)
    loss2 = seedloss(predict2, target2, lane_cap=128)
    jax.block_until_ready(loss2)
    ref2 = seedloss_ref(predict2, target2)
    assert jnp.allclose(loss2, ref2, rtol=1e-5, atol=1e-5), (loss2, ref2)

    print("KERNEL_OK")
</pallas_src>

<mosaic_0001>
module attributes {stable_mosaic.version = 11 : i64} {
  func.func @_seedloss_kernel(%arg0: i32, %arg1: i32, %arg2: memref<2x4x256xf32, #tpu.memory_space<vmem>>, %arg3: memref<2x4x256xf32, #tpu.memory_space<vmem>>, %arg4: memref<2x1x128xf32, #tpu.memory_space<vmem>>, %arg5: memref<2x1x256xf32, #tpu.memory_space<vmem>>, %arg6: memref<2x1x256xf32, #tpu.memory_space<vmem>>, %arg7: memref<2x1x256xf32, #tpu.memory_space<vmem>>, %arg8: memref<2x1x256xf32, #tpu.memory_space<vmem>>) attributes {dimension_semantics = [#tpu.dimension_semantics<parallel>, #tpu.dimension_semantics<arbitrary>], iteration_bounds = array<i64: 1, 1>, scalar_prefetch = 0 : i64, scratch_operands = 4 : i64, tpu.core_type = #tpu.core_type<tc>, window_params = [{transform_indices = @transform_0, window_bounds = array<i64: 2, 4, 256>}, {transform_indices = @transform_1, window_bounds = array<i64: 2, 4, 256>}, {transform_indices = @transform_2, window_bounds = array<i64: 2, 1, 128>}]} {
    %c0_i32 = arith.constant 0 : i32
    %0 = arith.cmpi eq, %arg1, %c0_i32 : i32
    %1 = arith.extui %0 : i1 to i32
    %c0_i32_0 = arith.constant 0 : i32
    %2 = arith.cmpi ne, %1, %c0_i32_0 : i32
    scf.if %2 {
      %cst_38 = arith.constant 0.000000e+00 : f32
      %51 = vector.broadcast %cst_38 : f32 to vector<2x1x256xf32>
      %c0_39 = arith.constant 0 : index
      %c0_40 = arith.constant 0 : index
      %c0_41 = arith.constant 0 : index
      %52 = vector.load %arg5[%c0_39, %c0_40, %c0_41] : memref<2x1x256xf32, #tpu.memory_space<vmem>>, vector<2x1x256xf32>
      tpu.vector_store %arg5[%c0_39, %c0_40, %c0_41], %51 {strides = array<i32>} : memref<2x1x256xf32, #tpu.memory_space<vmem>>, vector<2x1x256xf32>,
      %cst_42 = arith.constant 0.000000e+00 : f32
      %53 = vector.broadcast %cst_42 : f32 to vector<2x1x256xf32>
      %c0_43 = arith.constant 0 : index
      %c0_44 = arith.constant 0 : index
      %c0_45 = arith.constant 0 : index
      %54 = vector.load %arg6[%c0_43, %c0_44, %c0_45] : memref<2x1x256xf32, #tpu.memory_space<vmem>>, vector<2x1x256xf32>
      tpu.vector_store %arg6[%c0_43, %c0_44, %c0_45], %53 {strides = array<i32>} : memref<2x1x256xf32, #tpu.memory_space<vmem>>, vector<2x1x256xf32>,
      %cst_46 = arith.constant 0.000000e+00 : f32
      %55 = vector.broadcast %cst_46 : f32 to vector<2x1x256xf32>
      %c0_47 = arith.constant 0 : index
      %c0_48 = arith.constant 0 : index
      %c0_49 = arith.constant 0 : index
      %56 = vector.load %arg7[%c0_47, %c0_48, %c0_49] : memref<2x1x256xf32, #tpu.memory_space<vmem>>, vector<2x1x256xf32>
      tpu.vector_store %arg7[%c0_47, %c0_48, %c0_49], %55 {strides = array<i32>} : memref<2x1x256xf32, #tpu.memory_space<vmem>>, vector<2x1x256xf32>,
      %cst_50 = arith.constant 0.000000e+00 : f32
      %57 = vector.broadcast %cst_50 : f32 to vector<2x1x256xf32>
      %c0_51 = arith.constant 0 : index
      %c0_52 = arith.constant 0 : index
      %c0_53 = arith.constant 0 : index
      %58 = vector.load %arg8[%c0_51, %c0_52, %c0_53] : memref<2x1x256xf32, #tpu.memory_space<vmem>>, vector<2x1x256xf32>
      tpu.vector_store %arg8[%c0_51, %c0_52, %c0_53], %57 {strides = array<i32>} : memref<2x1x256xf32, #tpu.memory_space<vmem>>, vector<2x1x256xf32>,
    } else {
    }
    %c0 = arith.constant 0 : index
    %c0_1 = arith.constant 0 : index
    %c0_2 = arith.constant 0 : index
    %3 = vector.load %arg2[%c0, %c0_1, %c0_2] : memref<2x4x256xf32, #tpu.memory_space<vmem>>, vector<2x4x256xf32>
    %c0_3 = arith.constant 0 : index
    %c0_4 = arith.constant 0 : index
    %c0_5 = arith.constant 0 : index
    %4 = vector.load %arg3[%c0_3, %c0_4, %c0_5] : memref<2x4x256xf32, #tpu.memory_space<vmem>>, vector<2x4x256xf32>
    %cst = arith.constant dense<0xFF800000> : vector<2x256xf32>
    %5 = vector.multi_reduction <maximumf>, %3, %cst [1] : vector<2x4x256xf32> to vector<2x256xf32>
    %6 = vector.shape_cast %5 : vector<2x256xf32> to vector<2x1x256xf32>
    %7 = vector.broadcast %6 : vector<2x1x256xf32> to vector<2x4x256xf32>
    %8 = arith.subf %3, %7 : vector<2x4x256xf32>
    %9 = math.exp %8 : vector<2x4x256xf32>
    %cst_6 = arith.constant dense<0.000000e+00> : vector<2x256xf32>
    %10 = vector.multi_reduction <add>, %9, %cst_6 [1] : vector<2x4x256xf32> to vector<2x256xf32>
    %11 = vector.shape_cast %10 : vector<2x256xf32> to vector<2x1x256xf32>
    %12 = tpu.reciprocal %11 : vector<2x1x256xf32> -> vector<2x1x256xf32>
    %13 = vector.broadcast %12 : vector<2x1x256xf32> to vector<2x4x256xf32>
    %14 = arith.mulf %9, %13 : vector<2x4x256xf32>
    %cst_7 = arith.constant 9.99999974E-6 : f32
    %15 = vector.broadcast %cst_7 : f32 to vector<2x4x256xf32>
    %16 = arith.maximumf %14, %15 : vector<2x4x256xf32>
    %cst_8 = arith.constant dense<0.000000e+00> : vector<2x256xf32>
    %17 = vector.multi_reduction <add>, %16, %cst_8 [1] : vector<2x4x256xf32> to vector<2x256xf32>
    %18 = vector.shape_cast %17 : vector<2x256xf32> to vector<2x1x256xf32>
    %19 = math.log %11 : vector<2x1x256xf32>
    %20 = vector.broadcast %19 : vector<2x1x256xf32> to vector<2x4x256xf32>
    %21 = arith.subf %8, %20 : vector<2x4x256xf32>
    %cst_9 = arith.constant -11.5129251 : f32
    %22 = vector.broadcast %cst_9 : f32 to vector<2x4x256xf32>
    %23 = arith.maximumf %21, %22 : vector<2x4x256xf32>
    %24 = math.log %18 : vector<2x1x256xf32>
    %25 = vector.broadcast %24 : vector<2x1x256xf32> to vector<2x4x256xf32>
    %26 = arith.subf %23, %25 : vector<2x4x256xf32>
    %27 = arith.mulf %4, %26 : vector<2x4x256xf32>
    %28 = vector.extract_strided_slice %27 {offsets = [0, 0, 0], sizes = [2, 1, 256], strides = [1, 1, 1]} : vector<2x4x256xf32> to vector<2x1x256xf32>
    %cst_10 = arith.constant dense<0.000000e+00> : vector<2x256xf32>
    %29 = vector.multi_reduction <add>, %27, %cst_10 [1] : vector<2x4x256xf32> to vector<2x256xf32>
    %30 = vector.shape_cast %29 : vector<2x256xf32> to vector<2x1x256xf32>
    %31 = arith.subf %30, %28 : vector<2x1x256xf32>
    %32 = vector.extract_strided_slice %4 {offsets = [0, 0, 0], sizes = [2, 1, 256], strides = [1, 1, 1]} : vector<2x4x256xf32> to vector<2x1x256xf32>
    %cst_11 = arith.constant dense<0.000000e+00> : vector<2x256xf32>
    %33 = vector.multi_reduction <add>, %4, %cst_11 [1] : vector<2x4x256xf32> to vector<2x256xf32>
    %34 = vector.shape_cast %33 : vector<2x256xf32> to vector<2x1x256xf32>
    %35 = arith.subf %34, %32 : vector<2x1x256xf32>
    %c0_12 = arith.constant 0 : index
    %c0_13 = arith.constant 0 : index
    %c0_14 = arith.constant 0 : index
    %36 = vector.load %arg5[%c0_12, %c0_13, %c0_14] : memref<2x1x256xf32, #tpu.memory_space<vmem>>, vector<2x1x256xf32>
    %37 = arith.addf %36, %31 : vector<2x1x256xf32>
    %c0_15 = arith.constant 0 : index
    %c0_16 = arith.constant 0 : index
    %c0_17 = arith.constant 0 : index
    %38 = vector.load %arg5[%c0_15, %c0_16, %c0_17] : memref<2x1x256xf32, #tpu.memory_space<vmem>>, vector<2x1x256xf32>
    tpu.vector_store %arg5[%c0_15, %c0_16, %c0_17], %37 {strides = array<i32>} : memref<2x1x256xf32, #tpu.memory_space<vmem>>, vector<2x1x256xf32>,
    %c0_18 = arith.constant 0 : index
    %c0_19 = arith.constant 0 : index
    %c0_20 = arith.constant 0 : index
    %39 = vector.load %arg6[%c0_18, %c0_19, %c0_20] : memref<2x1x256xf32, #tpu.memory_space<vmem>>, vector<2x1x256xf32>
    %40 = arith.addf %39, %28 : vector<2x1x256xf32>
    %c0_21 = arith.constant 0 : index
    %c0_22 = arith.constant 0 : index
    %c0_23 = arith.constant 0 : index
    %41 = vector.load %arg6[%c0_21, %c0_22, %c0_23] : memref<2x1x256xf32, #tpu.memory_space<vmem>>, vector<2x1x256xf32>
    tpu.vector_store %arg6[%c0_21, %c0_22, %c0_23], %40 {strides = array<i32>} : memref<2x1x256xf32, #tpu.memory_space<vmem>>, vector<2x1x256xf32>,
    %c0_24 = arith.constant 0 : index
    %c0_25 = arith.constant 0 : index
    %c0_26 = arith.constant 0 : index
    %42 = vector.load %arg7[%c0_24, %c0_25, %c0_26] : memref<2x1x256xf32, #tpu.memory_space<vmem>>, vector<2x1x256xf32>
    %43 = arith.addf %42, %35 : vector<2x1x256xf32>
    %c0_27 = arith.constant 0 : index
    %c0_28 = arith.constant 0 : index
    %c0_29 = arith.constant 0 : index
    %44 = vector.load %arg7[%c0_27, %c0_28, %c0_29] : memref<2x1x256xf32, #tpu.memory_space<vmem>>, vector<2x1x256xf32>
    tpu.vector_store %arg7[%c0_27, %c0_28, %c0_29], %43 {strides = array<i32>} : memref<2x1x256xf32, #tpu.memory_space<vmem>>, vector<2x1x256xf32>,
    %c0_30 = arith.constant 0 : index
    %c0_31 = arith.constant 0 : index
    %c0_32 = arith.constant 0 : index
    %45 = vector.load %arg8[%c0_30, %c0_31, %c0_32] : memref<2x1x256xf32, #tpu.memory_space<vmem>>, vector<2x1x256xf32>
    %46 = arith.addf %45, %32 : vector<2x1x256xf32>
    %c0_33 = arith.constant 0 : index
    %c0_34 = arith.constant 0 : index
    %c0_35 = arith.constant 0 : index
    %47 = vector.load %arg8[%c0_33, %c0_34, %c0_35] : memref<2x1x256xf32, #tpu.memory_space<vmem>>, vector<2x1x256xf32>
    tpu.vector_store %arg8[%c0_33, %c0_34, %c0_35], %46 {strides = array<i32>} : memref<2x1x256xf32, #tpu.memory_space<vmem>>, vector<2x1x256xf32>,
    %c0_i32_36 = arith.constant 0 : i32
    %48 = arith.cmpi eq, %arg1, %c0_i32_36 : i32
    %49 = arith.extui %48 : i1 to i32
    %c0_i32_37 = arith.constant 0 : i32
    %50 = arith.cmpi ne, %49, %c0_i32_37 : i32
    scf.if %50 {
      %c0_38 = arith.constant 0 : index
      %c0_39 = arith.constant 0 : index
      %c0_40 = arith.constant 0 : index
      %51 = vector.load %arg5[%c0_38, %c0_39, %c0_40] : memref<2x1x256xf32, #tpu.memory_space<vmem>>, vector<2x1x256xf32>
      %cst_41 = arith.constant dense<0.000000e+00> : vector<2x1xf32>
      %52 = vector.multi_reduction <add>, %51, %cst_41 [2] : vector<2x1x256xf32> to vector<2x1xf32>
      %53 = vector.shape_cast %52 : vector<2x1xf32> to vector<2x1x1xf32>
      %c0_42 = arith.constant 0 : index
      %c0_43 = arith.constant 0 : index
      %c0_44 = arith.constant 0 : index
      %54 = vector.load %arg6[%c0_42, %c0_43, %c0_44] : memref<2x1x256xf32, #tpu.memory_space<vmem>>, vector<2x1x256xf32>
      %cst_45 = arith.constant dense<0.000000e+00> : vector<2x1xf32>
      %55 = vector.multi_reduction <add>, %54, %cst_45 [2] : vector<2x1x256xf32> to vector<2x1xf32>
      %56 = vector.shape_cast %55 : vector<2x1xf32> to vector<2x1x1xf32>
      %c0_46 = arith.constant 0 : index
      %c0_47 = arith.constant 0 : index
      %c0_48 = arith.constant 0 : index
      %57 = vector.load %arg7[%c0_46, %c0_47, %c0_48] : memref<2x1x256xf32, #tpu.memory_space<vmem>>, vector<2x1x256xf32>
      %cst_49 = arith.constant dense<0.000000e+00> : vector<2x1xf32>
      %58 = vector.multi_reduction <add>, %57, %cst_49 [2] : vector<2x1x256xf32> to vector<2x1xf32>
      %59 = vector.shape_cast %58 : vector<2x1xf32> to vector<2x1x1xf32>
      %c0_50 = arith.constant 0 : index
      %c0_51 = arith.constant 0 : index
      %c0_52 = arith.constant 0 : index
      %60 = vector.load %arg8[%c0_50, %c0_51, %c0_52] : memref<2x1x256xf32, #tpu.memory_space<vmem>>, vector<2x1x256xf32>
      %cst_53 = arith.constant dense<0.000000e+00> : vector<2x1xf32>
      %61 = vector.multi_reduction <add>, %60, %cst_53 [2] : vector<2x1x256xf32> to vector<2x1xf32>
      %62 = vector.shape_cast %61 : vector<2x1xf32> to vector<2x1x1xf32>
      %cst_54 = arith.constant 9.99999974E-6 : f32
      %63 = vector.broadcast %cst_54 : f32 to vector<2x1x1xf32>
      %64 = arith.addf %59, %63 : vector<2x1x1xf32>
      %65 = arith.divf %53, %64 : vector<2x1x1xf32>
      %cst_55 = arith.constant 9.99999974E-6 : f32
      %66 = vector.broadcast %cst_55 : f32 to vector<2x1x1xf32>
      %67 = arith.addf %62, %66 : vector<2x1x1xf32>
      %68 = arith.divf %56, %67 : vector<2x1x1xf32>
      %69 = arith.addf %65, %68 : vector<2x1x1xf32>
      %70 = vector.shape_cast %69 : vector<2x1x1xf32> to vector<2x1x1xf32>
      %71 = vector.broadcast %70 : vector<2x1x1xf32> to vector<2x1x128xf32>
      %c0_56 = arith.constant 0 : index
      %c0_57 = arith.constant 0 : index
      %c0_58 = arith.constant 0 : index
      %72 = vector.load %arg4[%c0_56, %c0_57, %c0_58] : memref<2x1x128xf32, #tpu.memory_space<vmem>>, vector<2x1x128xf32>
      tpu.vector_store %arg4[%c0_56, %c0_57, %c0_58], %71 {strides = array<i32>} : memref<2x1x128xf32, #tpu.memory_space<vmem>>, vector<2x1x128xf32>,
    } else {
    }
    return
  }
  func.func @transform_0(%arg0: i32, %arg1: i32) -> (i32, i32, i32) {
    %c0_i32 = arith.constant 0 : i32
    %c0_i32_0 = arith.constant 0 : i32
    return %arg0, %c0_i32, %arg1 : i32, i32, i32
  }
  func.func @transform_1(%arg0: i32, %arg1: i32) -> (i32, i32, i32) {
    %c0_i32 = arith.constant 0 : i32
    %c0_i32_0 = arith.constant 0 : i32
    return %arg0, %c0_i32, %arg1 : i32, i32, i32
  }
  func.func @transform_2(%arg0: i32, %arg1: i32) -> (i32, i32, i32) {
    %c0_i32 = arith.constant 0 : i32
    %c0_i32_0 = arith.constant 0 : i32
    %c0_i32_1 = arith.constant 0 : i32
    return %arg0, %c0_i32, %c0_i32_0 : i32, i32, i32
  }
}

</mosaic_0001>

<llo_original>
// kernel: tpu_custom_call.1
$region0: #{tpu_custom_call.1}
  #allocation0 [shape = 'u32[]', space=smem, size = 0x4, offset = 0x4, fixed_abs, tag = 'smem constant byte address 0x4 - core index']
  #allocation1 [shape = 'u32[144,128]{1,0:T(1,128)}', space=vmem, size = 0x12000, scoped, tag = 'internal scratch']
  #allocation2 [shape = 'f32[2,1,256]{2,1,0:T(1,128)}', space=vmem, size = 0x800, scoped, tag = 'scratch operand']
  #allocation3 [shape = 'f32[2,1,256]{2,1,0:T(1,128)}', space=vmem, size = 0x800, scoped, tag = 'scratch operand']
  #allocation4 [shape = 'f32[2,1,256]{2,1,0:T(1,128)}', space=vmem, size = 0x800, scoped, tag = 'scratch operand']
  #allocation5 [shape = 'f32[2,1,256]{2,1,0:T(1,128)}', space=vmem, size = 0x800, scoped, tag = 'scratch operand']
  %s0 = inlined_call_operand.hbm [shape: f32[2,4,256], index: 0, kind: input, shape index: {}]
  %s1 = inlined_call_operand.hbm [shape: f32[2,4,256], index: 1, kind: input, shape index: {}]
  %s2 = inlined_call_operand.hbm [shape: f32[2,1,128], index: 2, kind: output, shape index: {}]
  %s3 = sld [smem:[#allocation0]]
  $region34: #{tpu_custom_call.1} parent=0
    _
  %s5 = ssub.s32 1, %s3
  %s6 = scalar_select 0, %s5, %s3
  $region1: #{tpu_custom_call.1} parent=0
    #allocation6 [shape = 'u8[8192]{0}', space=vmem, size = 0x2000, scoped, tag = 'input window, operand 0, single buffered']
    #allocation7 [shape = 's32[1]{0}', space=sflag, size = 0x4, scoped, tag = 'scoped memory for tpu_custom_call.1']
    #allocation8 [shape = 's32[1]{0}', space=sflag, size = 0x4, scoped, tag = 'scoped memory for tpu_custom_call.1']
    #allocation9 [shape = 'u8[8192]{0}', space=vmem, size = 0x2000, scoped, tag = 'input window, operand 1, single buffered']
    #allocation10 [shape = 's32[1]{0}', space=sflag, size = 0x4, scoped, tag = 'scoped memory for tpu_custom_call.1']
    #allocation11 [shape = 'u8[1024]{0}', space=vmem, size = 0x400, scoped, tag = 'output window, operand 0, single buffered']
    %7 = vsyncpa [#allocation7], 0
    %8 = vsyncpa [#allocation10], 0
    %9 = vsyncpa [#allocation8], 0
    // Predicated region
    $region2: #{tpu_custom_call.1} parent=1 // pred_check
      _
    $region3: #{tpu_custom_call.1} parent=1 // pred_check_branch
      %11 = sbr.rel (0) target = $region5
    $region4: #{tpu_custom_call.1} parent=1 // pred_region
      %s13 = ssub.s32 256, 256
      %14 = vsyncadd [#allocation7], %s13
      %s15 = sshll.u32 [#allocation6], 4
      %s16 = int_to_ptr.vmem [resolvable:$true] %s15
      %21 = dma.hbm_to_vmem [thread:$0]  %s0, 256, %s16, [#allocation7], 128, 128, 8
    $region5: #{tpu_custom_call.1} parent=1 // pred_fallthru
      _
    // Predicated region
    $region6: #{tpu_custom_call.1} parent=1 // pred_check
      _
    $region7: #{tpu_custom_call.1} parent=1 // pred_check_branch
      %23 = sbr.rel (0) target = $region9
    $region8: #{tpu_custom_call.1} parent=1 // pred_region
      %s25 = ssub.s32 256, 256
      %26 = vsyncadd [#allocation10], %s25
      %s27 = sshll.u32 [#allocation9], 4
      %s28 = int_to_ptr.vmem [resolvable:$true] %s27
      %33 = dma.hbm_to_vmem [thread:$0]  %s1, 256, %s28, [#allocation10], 128, 128, 8
    $region9: #{tpu_custom_call.1} parent=1 // pred_fallthru
      _
    // Predicated region
    $region10: #{tpu_custom_call.1} parent=1 // pred_check
      _
    $region11: #{tpu_custom_call.1} parent=1 // pred_check_branch
      %35 = sbr.rel (0) target = $region13
    $region12: #{tpu_custom_call.1} parent=1 // pred_region
      %36 = dma.done [#allocation7], 256
    $region13: #{tpu_custom_call.1} parent=1 // pred_fallthru
      _
    // Predicated region
    $region14: #{tpu_custom_call.1} parent=1 // pred_check
      _
    $region15: #{tpu_custom_call.1} parent=1 // pred_check_branch
      %38 = sbr.rel (0) target = $region17
    $region16: #{tpu_custom_call.1} parent=1 // pred_region
      %39 = dma.done [#allocation10], 256
    $region17: #{tpu_custom_call.1} parent=1 // pred_fallthru
      _
    %p40 = scmp.eq.s32.totalorder 0, 0
    // Predicated region
    $region18: #{tpu_custom_call.1} parent=1 // pred_check
      %p41 = pneg %p40
    $region19: #{tpu_custom_call.1} parent=1 // pred_check_branch
      %43 = sbr.rel (%p41) target = $region21
    $region20: #{tpu_custom_call.1} parent=1 // pred_region
      %v44 = vlaneseq
      %vm45 = vcmp.ge.s32.totalorder %v44, 0
      %vm46 = vcmp.lt.s32.totalorder %v44, 256
      %vm47 = vmand %vm45, %vm46
      %48 = vst.msk [vmem:[#allocation2] sm:$0x3] %vm47, 0.0
      %49 = vst.msk [vmem:[#allocation2 + $0x2] sm:$0x3] %vm47, 0.0
      %50 = vst.msk [vmem:[#allocation3] sm:$0x3] %vm47, 0.0
      %51 = vst.msk [vmem:[#allocation3 + $0x2] sm:$0x3] %vm47, 0.0
      %52 = vst.msk [vmem:[#allocation4] sm:$0x3] %vm47, 0.0
      %53 = vst.msk [vmem:[#allocation4 + $0x2] sm:$0x3] %vm47, 0.0
      %54 = vst.msk [vmem:[#allocation5] sm:$0x3] %vm47, 0.0
      %55 = vst.msk [vmem:[#allocation5 + $0x2] sm:$0x3] %vm47, 0.0
    $region21: #{tpu_custom_call.1} parent=1 // pred_fallthru
      _
    %v56 = vld [vmem:[#allocation6] sm:$0xff]
    %v57 = vld [vmem:[#allocation6 + $0x8] sm:$0xff]
    %v58 = vld [vmem:[#allocation9] sm:$0xff]
    %v59 = vld [vmem:[#allocation9 + $0x8] sm:$0xff]
    %v62 = vcombine.high %v56, %v56
    %v63 = vcombine.high %v57, %v57
    %vm66 = vcmask 1043456
    %v67 = vsel %vm66, %v56, -inf
    %v68 = vrot.slane %v67, 4
    %v69 = vmax.f32 %v67, %v68
    %v70 = vrot.slane %v69, 2
    %v71 = vmax.f32 %v69, %v70
    %v72 = vrot.slane %v71, 1
    %v73 = vmax.f32 %v71, %v72
    %v74 = vsel %vm66, %v62, -inf
    %v75 = vrot.slane %v74, 4
    %v76 = vmax.f32 %v74, %v75
    %v77 = vrot.slane %v76, 2
    %v78 = vmax.f32 %v76, %v77
    %v79 = vrot.slane %v78, 1
    %v80 = vmax.f32 %v78, %v79
    %v81 = vsel %vm66, %v57, -inf
    %v82 = vrot.slane %v81, 4
    %v83 = vmax.f32 %v81, %v82
    %v84 = vrot.slane %v83, 2
    %v85 = vmax.f32 %v83, %v84
    %v86 = vrot.slane %v85, 1
    %v87 = vmax.f32 %v85, %v86
    %v88 = vsel %vm66, %v63, -inf
    %v89 = vrot.slane %v88, 4
    %v90 = vmax.f32 %v88, %v89
    %v91 = vrot.slane %v90, 2
    %v92 = vmax.f32 %v90, %v91
    %v93 = vrot.slane %v92, 1
    %v94 = vmax.f32 %v92, %v93
    %v99 = vcombine.low %v73, %v80
    %v100 = vcombine.low %v87, %v94
    %v103 = vsub.f32 %v56, %v99
    %v104 = vsub.f32 %v57, %v100
    %v105 = vmul.f32 %v103, 1.442695
    %v106 = vpow.pop %v105
    %v107 = vmul.f32 %v104, 1.442695
    %v108 = vpow.pop %v107
    %v111 = vcombine.high %v106, %v106
    %v112 = vcombine.high %v108, %v108
    %v115 = vsel %vm66, %v106, 0.0
    %v116 = vrot.slane %v115, 4
    %v117 = vadd.f32 %v115, %v116
    %v118 = vrot.slane %v117, 2
    %v119 = vadd.f32 %v117, %v118
    %v120 = vrot.slane %v119, 1
    %v121 = vadd.f32 %v119, %v120
    %v122 = vsel %vm66, %v111, 0.0
    %v123 = vrot.slane %v122, 4
    %v124 = vadd.f32 %v122, %v123
    %v125 = vrot.slane %v124, 2
    %v126 = vadd.f32 %v124, %v125
    %v127 = vrot.slane %v126, 1
    %v128 = vadd.f32 %v126, %v127
    %v129 = vsel %vm66, %v108, 0.0
    %v130 = vrot.slane %v129, 4
    %v131 = vadd.f32 %v129, %v130
    %v132 = vrot.slane %v131, 2
    %v133 = vadd.f32 %v131, %v132
    %v134 = vrot.slane %v133, 1
    %v135 = vadd.f32 %v133, %v134
    %v136 = vsel %vm66, %v112, 0.0
    %v137 = vrot.slane %v136, 4
    %v138 = vadd.f32 %v136, %v137
    %v139 = vrot.slane %v138, 2
    %v140 = vadd.f32 %v138, %v139
    %v141 = vrot.slane %v140, 1
    %v142 = vadd.f32 %v140, %v141
    %v143 = vrcp.pop %v121
    %v144 = vrcp.pop %v128
    %v145 = vrcp.pop %v135
    %v146 = vrcp.pop %v142
    %v151 = vcombine.low %v143, %v144
    %v152 = vcombine.low %v145, %v146
    %v155 = vmul.f32 %v106, %v151
    %v156 = vmul.f32 %v108, %v152
    %v157 = vmax.f32 %v155, 1e-05
    %v158 = vmax.f32 %v156, 1e-05
    %v161 = vcombine.high %v157, %v157
    %v162 = vcombine.high %v158, %v158
    %v165 = vsel %vm66, %v157, 0.0
    %v166 = vrot.slane %v165, 4
    %v167 = vadd.f32 %v165, %v166
    %v168 = vrot.slane %v167, 2
    %v169 = vadd.f32 %v167, %v168
    %v170 = vrot.slane %v169, 1
    %v171 = vadd.f32 %v169, %v170
    %v172 = vsel %vm66, %v161, 0.0
    %v173 = vrot.slane %v172, 4
    %v174 = vadd.f32 %v172, %v173
    %v175 = vrot.slane %v174, 2
    %v176 = vadd.f32 %v174, %v175
    %v177 = vrot.slane %v176, 1
    %v178 = vadd.f32 %v176, %v177
    %v179 = vsel %vm66, %v158, 0.0
    %v180 = vrot.slane %v179, 4
    %v181 = vadd.f32 %v179, %v180
    %v182 = vrot.slane %v181, 2
    %v183 = vadd.f32 %v181, %v182
    %v184 = vrot.slane %v183, 1
    %v185 = vadd.f32 %v183, %v184
    %v186 = vsel %vm66, %v162, 0.0
    %v187 = vrot.slane %v186, 4
    %v188 = vadd.f32 %v186, %v187
    %v189 = vrot.slane %v188, 2
    %v190 = vadd.f32 %v188, %v189
    %v191 = vrot.slane %v190, 1
    %v192 = vadd.f32 %v190, %v191
    %v193 = vlog2.pop %v121
    %v194 = vmul.f32 %v193, 0.6931472
    %v195 = vlog2.pop %v128
    %v196 = vmul.f32 %v195, 0.6931472
    %v197 = vlog2.pop %v135
    %v198 = vmul.f32 %v197, 0.6931472
    %v199 = vlog2.pop %v142
    %v200 = vmul.f32 %v199, 0.6931472
    %v205 = vcombine.low %v194, %v196
    %v206 = vcombine.low %v198, %v200
    %v209 = vsub.f32 %v103, %v205
    %v210 = vsub.f32 %v104, %v206
    %v211 = vmax.f32 %v209, -11.512925
    %v212 = vmax.f32 %v210, -11.512925
    %v213 = vlog2.pop %v171
    %v214 = vmul.f32 %v213, 0.6931472
    %v215 = vlog2.pop %v178
    %v216 = vmul.f32 %v215, 0.6931472
    %v217 = vlog2.pop %v185
    %v218 = vmul.f32 %v217, 0.6931472
    %v219 = vlog2.pop %v192
    %v220 = vmul.f32 %v219, 0.6931472
    %v225 = vcombine.low %v214, %v216
    %v226 = vcombine.low %v218, %v220
    %v229 = vsub.f32 %v211, %v225
    %v230 = vsub.f32 %v212, %v226
    %v231 = vmul.f32 %v58, %v229
    %v232 = vmul.f32 %v59, %v230
    %v235 = vcombine.high %v231, %v231
    %v236 = vcombine.high %v232, %v232
    %v239 = vsel %vm66, %v231, 0.0
    %v240 = vrot.slane %v239, 4
    %v241 = vadd.f32 %v239, %v240
    %v242 = vrot.slane %v241, 2
    %v243 = vadd.f32 %v241, %v242
    %v244 = vrot.slane %v243, 1
    %v245 = vadd.f32 %v243, %v244
    %v246 = vsel %vm66, %v235, 0.0
    %v247 = vrot.slane %v246, 4
    %v248 = vadd.f32 %v246, %v247
    %v249 = vrot.slane %v248, 2
    %v250 = vadd.f32 %v248, %v249
    %v251 = vrot.slane %v250, 1
    %v252 = vadd.f32 %v250, %v251
    %v253 = vsel %vm66, %v232, 0.0
    %v254 = vrot.slane %v253, 4
    %v255 = vadd.f32 %v253, %v254
    %v256 = vrot.slane %v255, 2
    %v257 = vadd.f32 %v255, %v256
    %v258 = vrot.slane %v257, 1
    %v259 = vadd.f32 %v257, %v258
    %v260 = vsel %vm66, %v236, 0.0
    %v261 = vrot.slane %v260, 4
    %v262 = vadd.f32 %v260, %v261
    %v263 = vrot.slane %v262, 2
    %v264 = vadd.f32 %v262, %v263
    %v265 = vrot.slane %v264, 1
    %v266 = vadd.f32 %v264, %v265
    %v267 = vlaneseq
    %v268 = vshrl.u32 %v267, 7
    %v269 = vsub.s32 0, %v268
    %v270 = vrot.slane %v231, %v269
    %v271 = vlaneseq
    %v272 = vshrl.u32 %v271, 7
    %v273 = vsub.s32 4, %v272
    %v274 = vrot.slane %v231, %v273
    %v275 = vlaneseq
    %v276 = vshrl.u32 %v275, 7
    %v277 = vsub.s32 0, %v276
    %v278 = vrot.slane %v232, %v277
    %v279 = vlaneseq
    %v280 = vshrl.u32 %v279, 7
    %v281 = vsub.s32 4, %v280
    %v282 = vrot.slane %v232, %v281
    %v287 = vsub.f32 %v245, %v270
    %v288 = vsub.f32 %v252, %v274
    %v289 = vsub.f32 %v259, %v278
    %v290 = vsub.f32 %v266, %v282
    %v293 = vcombine.high %v58, %v58
    %v294 = vcombine.high %v59, %v59
    %v297 = vsel %vm66, %v58, 0.0
    %v298 = vrot.slane %v297, 4
    %v299 = vadd.f32 %v297, %v298
    %v300 = vrot.slane %v299, 2
    %v301 = vadd.f32 %v299, %v300
    %v302 = vrot.slane %v301, 1
    %v303 = vadd.f32 %v301, %v302
    %v304 = vsel %vm66, %v293, 0.0
    %v305 = vrot.slane %v304, 4
    %v306 = vadd.f32 %v304, %v305
    %v307 = vrot.slane %v306, 2
    %v308 = vadd.f32 %v306, %v307
    %v309 = vrot.slane %v308, 1
    %v310 = vadd.f32 %v308, %v309
    %v311 = vsel %vm66, %v59, 0.0
    %v312 = vrot.slane %v311, 4
    %v313 = vadd.f32 %v311, %v312
    %v314 = vrot.slane %v313, 2
    %v315 = vadd.f32 %v313, %v314
    %v316 = vrot.slane %v315, 1
    %v317 = vadd.f32 %v315, %v316
    %v318 = vsel %vm66, %v294, 0.0
    %v319 = vrot.slane %v318, 4
    %v320 = vadd.f32 %v318, %v319
    %v321 = vrot.slane %v320, 2
    %v322 = vadd.f32 %v320, %v321
    %v323 = vrot.slane %v322, 1
    %v324 = vadd.f32 %v322, %v323
    %v325 = vlaneseq
    %v326 = vshrl.u32 %v325, 7
    %v327 = vsub.s32 0, %v326
    %v328 = vrot.slane %v58, %v327
    %v329 = vlaneseq
    %v330 = vshrl.u32 %v329, 7
    %v331 = vsub.s32 4, %v330
    %v332 = vrot.slane %v58, %v331
    %v333 = vlaneseq
    %v334 = vshrl.u32 %v333, 7
    %v335 = vsub.s32 0, %v334
    %v336 = vrot.slane %v59, %v335
    %v337 = vlaneseq
    %v338 = vshrl.u32 %v337, 7
    %v339 = vsub.s32 4, %v338
    %v340 = vrot.slane %v59, %v339
    %v345 = vsub.f32 %v303, %v328
    %v346 = vsub.f32 %v310, %v332
    %v347 = vsub.f32 %v317, %v336
    %v348 = vsub.f32 %v324, %v340
    %v349 = vld [vmem:[#allocation2] sm:$0x3]
    %v350 = vld [vmem:[#allocation2 + $0x2] sm:$0x3]
    %v355 = vcombine.low %v287, %v288
    %v357 = vunpack.c.l.s4 1966171168
    %v358 = vunpack.c.0.s8 %v357
    %v359 = vlaneseq
    %v360 = vshrl.u32 %v359, 7
    %v361 = vsub.s32 %v358, %v360
    %v362 = vrot.slane %v355, %v361
    %v364 = vunpack.c.l.s4 1966171168
    %v365 = vunpack.c.0.s8 %v364
    %v366 = vlaneseq
    %v367 = vshrl.u32 %v366, 7
    %v368 = vsub.s32 %v365, %v367
    %v369 = vrot.slane %v362, %v368
    %v370 = vcombine.low %v289, %v290
    %v372 = vunpack.c.l.s4 1966171168
    %v373 = vunpack.c.0.s8 %v372
    %v374 = vlaneseq
    %v375 = vshrl.u32 %v374, 7
    %v376 = vsub.s32 %v373, %v375
    %v377 = vrot.slane %v370, %v376
    %v379 = vunpack.c.l.s4 1966171168
    %v380 = vunpack.c.0.s8 %v379
    %v381 = vlaneseq
    %v382 = vshrl.u32 %v381, 7
    %v383 = vsub.s32 %v380, %v382
    %v384 = vrot.slane %v377, %v383
    %v387 = vadd.f32 %v349, %v369
    %v388 = vadd.f32 %v350, %v384
    %v389 = vlaneseq
    %vm390 = vcmp.ge.s32.totalorder %v389, 0
    %vm391 = vcmp.lt.s32.totalorder %v389, 256
    %vm392 = vmand %vm390, %vm391
    %393 = vst.msk [vmem:[#allocation2] sm:$0x3] %vm392, %v387
    %394 = vst.msk [vmem:[#allocation2 + $0x2] sm:$0x3] %vm392, %v388
    %v395 = vld [vmem:[#allocation3] sm:$0x3]
    %v396 = vld [vmem:[#allocation3 + $0x2] sm:$0x3]
    %v398 = vunpack.c.l.s4 1966171168
    %v399 = vunpack.c.0.s8 %v398
    %v400 = vlaneseq
    %v401 = vshrl.u32 %v400, 7
    %v402 = vsub.s32 %v399, %v401
    %v403 = vrot.slane %v231, %v402
    %v405 = vunpack.c.l.s4 1966171168
    %v406 = vunpack.c.0.s8 %v405
    %v407 = vlaneseq
    %v408 = vshrl.u32 %v407, 7
    %v409 = vsub.s32 %v406, %v408
    %v410 = vrot.slane %v403, %v409
    %v412 = vunpack.c.l.s4 1966171168
    %v413 = vunpack.c.0.s8 %v412
    %v414 = vlaneseq
    %v415 = vshrl.u32 %v414, 7
    %v416 = vsub.s32 %v413, %v415
    %v417 = vrot.slane %v232, %v416
    %v419 = vunpack.c.l.s4 1966171168
    %v420 = vunpack.c.0.s8 %v419
    %v421 = vlaneseq
    %v422 = vshrl.u32 %v421, 7
    %v423 = vsub.s32 %v420, %v422
    %v424 = vrot.slane %v417, %v423
    %v427 = vadd.f32 %v395, %v410
    %v428 = vadd.f32 %v396, %v424
    %429 = vst.msk [vmem:[#allocation3] sm:$0x3] %vm392, %v427
    %430 = vst.msk [vmem:[#allocation3 + $0x2] sm:$0x3] %vm392, %v428
    %v431 = vld [vmem:[#allocation4] sm:$0x3]
    %v432 = vld [vmem:[#allocation4 + $0x2] sm:$0x3]
    %v437 = vcombine.low %v345, %v346
    %v439 = vunpack.c.l.s4 1966171168
    %v440 = vunpack.c.0.s8 %v439
    %v441 = vlaneseq
    %v442 = vshrl.u32 %v441, 7
    %v443 = vsub.s32 %v440, %v442
    %v444 = vrot.slane %v437, %v443
    %v446 = vunpack.c.l.s4 1966171168
    %v447 = vunpack.c.0.s8 %v446
    %v448 = vlaneseq
    %v449 = vshrl.u32 %v448, 7
    %v450 = vsub.s32 %v447, %v449
    %v451 = vrot.slane %v444, %v450
    %v452 = vcombine.low %v347, %v348
    %v454 = vunpack.c.l.s4 1966171168
    %v455 = vunpack.c.0.s8 %v454
    %v456 = vlaneseq
    %v457 = vshrl.u32 %v456, 7
    %v458 = vsub.s32 %v455, %v457
    %v459 = vrot.slane %v452, %v458
    %v461 = vunpack.c.l.s4 1966171168
    %v462 = vunpack.c.0.s8 %v461
    %v463 = vlaneseq
    %v464 = vshrl.u32 %v463, 7
    %v465 = vsub.s32 %v462, %v464
    %v466 = vrot.slane %v459, %v465
    %v469 = vadd.f32 %v431, %v451
    %v470 = vadd.f32 %v432, %v466
    %471 = vst.msk [vmem:[#allocation4] sm:$0x3] %vm392, %v469
    %472 = vst.msk [vmem:[#allocation4 + $0x2] sm:$0x3] %vm392, %v470
    %v473 = vld [vmem:[#allocation5] sm:$0x3]
    %v474 = vld [vmem:[#allocation5 + $0x2] sm:$0x3]
    %v476 = vunpack.c.l.s4 1966171168
    %v477 = vunpack.c.0.s8 %v476
    %v478 = vlaneseq
    %v479 = vshrl.u32 %v478, 7
    %v480 = vsub.s32 %v477, %v479
    %v481 = vrot.slane %v58, %v480
    %v483 = vunpack.c.l.s4 1966171168
    %v484 = vunpack.c.0.s8 %v483
    %v485 = vlaneseq
    %v486 = vshrl.u32 %v485, 7
    %v487 = vsub.s32 %v484, %v486
    %v488 = vrot.slane %v481, %v487
    %v490 = vunpack.c.l.s4 1966171168
    %v491 = vunpack.c.0.s8 %v490
    %v492 = vlaneseq
    %v493 = vshrl.u32 %v492, 7
    %v494 = vsub.s32 %v491, %v493
    %v495 = vrot.slane %v59, %v494
    %v497 = vunpack.c.l.s4 1966171168
    %v498 = vunpack.c.0.s8 %v497
    %v499 = vlaneseq
    %v500 = vshrl.u32 %v499, 7
    %v501 = vsub.s32 %v498, %v500
    %v502 = vrot.slane %v495, %v501
    %v505 = vadd.f32 %v473, %v488
    %v506 = vadd.f32 %v474, %v502
    %507 = vst.msk [vmem:[#allocation5] sm:$0x3] %vm392, %v505
    %508 = vst.msk [vmem:[#allocation5 + $0x2] sm:$0x3] %vm392, %v506
    // Predicated region
    $region22: #{tpu_custom_call.1} parent=1 // pred_check
      %p509 = pneg %p40
    $region23: #{tpu_custom_call.1} parent=1 // pred_check_branch
      %511 = sbr.rel (%p509) target = $region25
    $region24: #{tpu_custom_call.1} parent=1 // pred_region
      %v512 = vld [vmem:[#allocation2] sm:$0x3]
      %v513 = vld [vmem:[#allocation2 + $0x2] sm:$0x3]
      %v516 = vlaneseq
      %v517 = vshrl.u32 %v516, 7
      %v518 = vsub.s32 0, %v517
      %v519 = vrot.slane %v512, %v518
      %v520 = vlaneseq
      %v521 = vshrl.u32 %v520, 7
      %v522 = vsub.s32 1, %v521
      %v523 = vrot.slane %v512, %v522
      %v524 = vlaneseq
      %v525 = vshrl.u32 %v524, 7
      %v526 = vsub.s32 0, %v525
      %v527 = vrot.slane %v513, %v526
      %v528 = vlaneseq
      %v529 = vshrl.u32 %v528, 7
      %v530 = vsub.s32 1, %v529
      %v531 = vrot.slane %v513, %v530
      %vm536 = vcmask 1040384
      %v537 = vsel %vm536, %v519, 0.0
      %v538 = vsel %vm536, %v523, 0.0
      %v539 = vadd.f32 %v537, %v538
      %540 = vadd.xlane.f32.xlu0 %v539
      %v541 = vpop.xlane.xlu0 %540
      %v542 = vsel %vm536, %v527, 0.0
      %v543 = vsel %vm536, %v531, 0.0
      %v544 = vadd.f32 %v542, %v543
      %545 = vadd.xlane.f32.xlu0 %v544
      %v546 = vpop.xlane.xlu0 %545
      %v547 = vld [vmem:[#allocation3] sm:$0x3]
      %v548 = vld [vmem:[#allocation3 + $0x2] sm:$0x3]
      %v551 = vlaneseq
      %v552 = vshrl.u32 %v551, 7
      %v553 = vsub.s32 0, %v552
      %v554 = vrot.slane %v547, %v553
      %v555 = vlaneseq
      %v556 = vshrl.u32 %v555, 7
      %v557 = vsub.s32 1, %v556
      %v558 = vrot.slane %v547, %v557
      %v559 = vlaneseq
      %v560 = vshrl.u32 %v559, 7
      %v561 = vsub.s32 0, %v560
      %v562 = vrot.slane %v548, %v561
      %v563 = vlaneseq
      %v564 = vshrl.u32 %v563, 7
      %v565 = vsub.s32 1, %v564
      %v566 = vrot.slane %v548, %v565
      %v571 = vsel %vm536, %v554, 0.0
      %v572 = vsel %vm536, %v558, 0.0
      %v573 = vadd.f32 %v571, %v572
      %574 = vadd.xlane.f32.xlu0 %v573
      %v575 = vpop.xlane.xlu0 %574
      %v576 = vsel %vm536, %v562, 0.0
      %v577 = vsel %vm536, %v566, 0.0
      %v578 = vadd.f32 %v576, %v577
      %579 = vadd.xlane.f32.xlu0 %v578
      %v580 = vpop.xlane.xlu0 %579
      %v581 = vld [vmem:[#allocation4] sm:$0x3]
      %v582 = vld [vmem:[#allocation4 + $0x2] sm:$0x3]
      %v585 = vlaneseq
      %v586 = vshrl.u32 %v585, 7
      %v587 = vsub.s32 0, %v586
      %v588 = vrot.slane %v581, %v587
      %v589 = vlaneseq
      %v590 = vshrl.u32 %v589, 7
      %v591 = vsub.s32 1, %v590
      %v592 = vrot.slane %v581, %v591
      %v593 = vlaneseq
      %v594 = vshrl.u32 %v593, 7
      %v595 = vsub.s32 0, %v594
      %v596 = vrot.slane %v582, %v595
      %v597 = vlaneseq
      %v598 = vshrl.u32 %v597, 7
      %v599 = vsub.s32 1, %v598
      %v600 = vrot.slane %v582, %v599
      %v605 = vsel %vm536, %v588, 0.0
      %v606 = vsel %vm536, %v592, 0.0
      %v607 = vadd.f32 %v605, %v606
      %608 = vadd.xlane.f32.xlu0 %v607
      %v609 = vpop.xlane.xlu0 %608
      %v610 = vsel %vm536, %v596, 0.0
      %v611 = vsel %vm536, %v600, 0.0
      %v612 = vadd.f32 %v610, %v611
      %613 = vadd.xlane.f32.xlu0 %v612
      %v614 = vpop.xlane.xlu0 %613
      %v615 = vld [vmem:[#allocation5] sm:$0x3]
      %v616 = vld [vmem:[#allocation5 + $0x2] sm:$0x3]
      %v619 = vlaneseq
      %v620 = vshrl.u32 %v619, 7
      %v621 = vsub.s32 0, %v620
      %v622 = vrot.slane %v615, %v621
      %v623 = vlaneseq
      %v624 = vshrl.u32 %v623, 7
      %v625 = vsub.s32 1, %v624
      %v626 = vrot.slane %v615, %v625
      %v627 = vlaneseq
      %v628 = vshrl.u32 %v627, 7
      %v629 = vsub.s32 0, %v628
      %v630 = vrot.slane %v616, %v629
      %v631 = vlaneseq
      %v632 = vshrl.u32 %v631, 7
      %v633 = vsub.s32 1, %v632
      %v634 = vrot.slane %v616, %v633
      %v639 = vsel %vm536, %v622, 0.0
      %v640 = vsel %vm536, %v626, 0.0
      %v641 = vadd.f32 %v639, %v640
      %642 = vadd.xlane.f32.xlu0 %v641
      %v643 = vpop.xlane.xlu0 %642
      %v644 = vsel %vm536, %v630, 0.0
      %v645 = vsel %vm536, %v634, 0.0
      %v646 = vadd.f32 %v644, %v645
      %647 = vadd.xlane.f32.xlu0 %v646
      %v648 = vpop.xlane.xlu0 %647
      %v649 = vadd.f32 %v609, 1e-05
      %v650 = vadd.f32 %v614, 1e-05
      %v651 = vrcp.pop %v649
      %v652 = vmul.f32 %v541, %v651
      %v653 = vrcp.pop %v650
      %v654 = vmul.f32 %v546, %v653
      %v655 = vadd.f32 %v643, 1e-05
      %v656 = vadd.f32 %v648, 1e-05
      %v657 = vrcp.pop %v655
      %v658 = vmul.f32 %v575, %v657
      %v659 = vrcp.pop %v656
      %v660 = vmul.f32 %v580, %v659
      %v661 = vadd.f32 %v652, %v658
      %v662 = vadd.f32 %v654, %v660
      %663 = vst [vmem:[#allocation11] sm:$0x1] %v661
      %664 = vst [vmem:[#allocation11 + $0x1] sm:$0x1] %v662
    $region25: #{tpu_custom_call.1} parent=1 // pred_fallthru
      _
    // Predicated region
    $region26: #{tpu_custom_call.1} parent=1 // pred_check
      _
    $region27: #{tpu_custom_call.1} parent=1 // pred_check_branch
      %666 = sbr.rel (0) target = $region29
    $region28: #{tpu_custom_call.1} parent=1 // pred_region
      %s668 = ssub.s32 32, 32
      %669 = vsyncadd [#allocation8], %s668
      %s670 = sshll.u32 [#allocation11], 4
      %s671 = int_to_ptr.vmem [resolvable:$true] %s670
      %676 = dma.vmem_to_hbm [thread:$0]  %s671, 32, %s2, [#allocation8], 16, 16, 1
    $region29: #{tpu_custom_call.1} parent=1 // pred_fallthru
      _
    // Predicated region
    $region30: #{tpu_custom_call.1} parent=1 // pred_check
      _
    $region31: #{tpu_custom_call.1} parent=1 // pred_check_branch
      %678 = sbr.rel (0) target = $region33
    $region32: #{tpu_custom_call.1} parent=1 // pred_region
      %679 = dma.done [#allocation8], 32
    $region33: #{tpu_custom_call.1} parent=1 // pred_fallthru
      _
    %680 = vsyncpa [#allocation7], 1
    %681 = vsyncpa [#allocation10], 1
    %682 = vsyncpa [#allocation8], 1

</llo_original>
